<compile_context>
chip_gen: v5e
topology: v5e:2x2
jax: 0.10.0
libtpu: 0.0.40
codegen_flags: <defaults>
</compile_context>

<pallas_src>
import functools

import jax
import jax.numpy as jnp
from jax.experimental import pallas as pl
from jax.experimental.pallas import tpu as pltpu


def _ct_body(x_ref, o_ref, step, C, horizon, HW):
    """Shared kernel body.

    x_ref: (TB, C*HW)             lane-dense input tile
    o_ref: (TB, (C+horizon)*HW)   lane-dense output tile
    step:  int scalar (static python int or value read from SMEM)
    """
    TB = o_ref.shape[0]
    cond_w = horizon * HW

    # Pass-through copy of the original channels.  Lane range [0, C*HW) is a
    # multiple of 128 -> unmasked full-vreg stores.
    o_ref[:, 0 : C * HW] = x_ref[...]

    # One-hot-of-`step` conditioning channels, broadcast over rows and pixels.
    # Flattened tail element j belongs to conditioning channel j // HW; use a
    # range compare instead of a divide.  With a static `step` this
    # constant-folds to a baked-in slab.
    # Note: if step is outside [0, horizon) the conditioning channels are all
    # zeros (the PyTorch original would raise an IndexError instead).
    idx = jax.lax.broadcasted_iota(jnp.int32, (1, cond_w), 1)
    lo = step * HW
    onehot = ((idx >= lo) & (idx < lo + HW)).astype(o_ref.dtype)
    o_ref[:, C * HW :] = jnp.broadcast_to(onehot, (TB, cond_w))


def _static_kernel(x_ref, o_ref, *, step, C, horizon, HW):
    _ct_body(x_ref, o_ref, step, C, horizon, HW)


def _dynamic_kernel(step_ref, x_ref, o_ref, *, C, horizon, HW):
    _ct_body(x_ref, o_ref, step_ref[0], C, horizon, HW)


def condition_time(x, step, horizon, dims=2, block_rows=None):
    """Pallas equivalent of ConditionTime(horizon, dims=2).forward(x, step)."""
    assert dims == 2, "only channel-dim (dims=2) concatenation is supported"
    B, S, C, H, W = x.shape
    N = B * S
    HW = H * W
    Cout = C + horizon
    dtype_bytes = jnp.dtype(x.dtype).itemsize

    # Fully lane-dense views: one row per (b, s), all channel/pixel data on
    # the lane axis.  These reshapes are views (contiguous), no data movement.
    xf = x.reshape(N, C * HW)

    # ---- pick rows-per-grid-step (TB) ----------------------------------------
    if block_rows is None:
        # Double-buffered VMEM footprint per grid step:
        #   2 * (in_tile + out_tile) = 2 * TB * (C + Cout) * HW * bytes
        # Keep it <= ~8 MiB so it fits comfortably inside v5e's 16 MiB default
        # scoped VMEM and v7x's 64 MiB physical VMEM.
        budget = 8 * 1024 * 1024
        per_row = 2 * (C + Cout) * HW * dtype_bytes
        tb_cap = max(1, budget // per_row)
        # Keep >= 2 grid steps when possible so the "parallel" axis can be
        # sharded across v7x's two TensorCores.
        tb_cap = min(int(tb_cap), max(1, N // 2))
        # Largest sublane-aligned (multiple of 8) divisor of N under the cap;
        # fall back to a single full-extent block (always layout-legal).
        aligned = [d for d in range(8, tb_cap + 1, 8) if N % d == 0]
        tb = max(aligned) if aligned else N
    else:
        tb = block_rows
        assert N % tb == 0, "block_rows must divide B*S"
        assert tb % 8 == 0 or tb == N, "block_rows must be sublane-aligned"

    grid = (N // tb,)

    # Explicit scoped-VMEM limit: enough for the double-buffered tiles plus
    # headroom, but well under every generation's physical VMEM (64 MiB v7x).
    tile_bytes = 2 * tb * (C + Cout) * HW * dtype_bytes
    vmem_limit = min(48 * 1024 * 1024, max(int(tile_bytes * 1.5), 16 * 1024 * 1024))

    compiler_params = pltpu.CompilerParams(
        dimension_semantics=("parallel",),
        vmem_limit_bytes=vmem_limit,
    )
    out_shape = jax.ShapeDtypeStruct((N, Cout * HW), x.dtype)

    static_step = isinstance(step, int)
    if static_step:
        assert 0 <= step < horizon, f"step {step} out of range [0, {horizon})"
        kernel = functools.partial(
            _static_kernel, step=step, C=C, horizon=horizon, HW=HW)
        grid_spec = pltpu.PrefetchScalarGridSpec(
            num_scalar_prefetch=0,
            grid=grid,
            in_specs=[pl.BlockSpec((tb, C * HW), lambda i: (i, 0))],
            out_specs=pl.BlockSpec((tb, Cout * HW), lambda i: (i, 0)),
        )
        out = pl.pallas_call(
            kernel,
            out_shape=out_shape,
            grid_spec=grid_spec,
            compiler_params=compiler_params,
        )(xf)
    else:
        # Dynamic (traced) step: pass it via SMEM scalar prefetch.
        kernel = functools.partial(_dynamic_kernel, C=C, horizon=horizon, HW=HW)
        step_arr = jnp.asarray(step, dtype=jnp.int32).reshape(1)
        grid_spec = pltpu.PrefetchScalarGridSpec(
            num_scalar_prefetch=1,
            grid=grid,
            in_specs=[pl.BlockSpec((tb, C * HW), lambda i, step_ref: (i, 0))],
            out_specs=pl.BlockSpec((tb, Cout * HW), lambda i, step_ref: (i, 0)),
        )
        out = pl.pallas_call(
            kernel,
            out_shape=out_shape,
            grid_spec=grid_spec,
            compiler_params=compiler_params,
        )(step_arr, xf)

    out = out.reshape(B, S, Cout, H, W)
    assert out.shape[dims] == Cout, (
        f"Expected {Cout} channels, got {out.shape[dims]}"
    )
    return out


def _reference(x, step, horizon):
    B, S, C, H, W = x.shape
    times = jnp.eye(horizon, dtype=x.dtype)[step]            # (horizon,)
    times = times[:, None, None]                              # (horizon, 1, 1)
    ones = jnp.ones((1, H, W), dtype=x.dtype)
    ct = jnp.broadcast_to(times * ones, (B, S, horizon, H, W))
    return jnp.concatenate([x, ct], axis=2)


if __name__ == "__main__":
    # Small shapes consistent with the module's forward: (B, S, C, H, W)
    B, S, C, H, W = 2, 8, 4, 16, 16
    horizon = 6
    step = 3

    key = jax.random.PRNGKey(0)
    x = jax.random.normal(key, (B, S, C, H, W), dtype=jnp.float32)

    ref = _reference(x, step, horizon)

    # Static (trace-time) step path — one-hot constant-folds in the kernel.
    out = condition_time(x, step, horizon, dims=2)
    out = jax.block_until_ready(out)
    assert out.shape == (B, S, C + horizon, H, W), out.shape
    assert jnp.allclose(out, ref), "static-step mismatch vs reference"

    # Dynamic step path (scalar prefetch) — same result.
    out_dyn = condition_time(x, jnp.int32(step), horizon, dims=2)
    out_dyn = jax.block_until_ready(out_dyn)
    assert jnp.allclose(out_dyn, ref), "dynamic-step mismatch vs reference"

    print("KERNEL_OK")
</pallas_src>

<mosaic_0001>
module attributes {stable_mosaic.version = 11 : i64} {
  func.func @_static_kernel(%arg0: i32, %arg1: memref<8x1024xf32, #tpu.memory_space<vmem>>, %arg2: memref<8x2560xf32, #tpu.memory_space<vmem>>) attributes {dimension_semantics = [#tpu.dimension_semantics<parallel>], iteration_bounds = array<i64: 2>, scalar_prefetch = 0 : i64, scratch_operands = 0 : i64, tpu.core_type = #tpu.core_type<tc>, window_params = [{transform_indices = @transform_0, window_bounds = array<i64: 8, 1024>}, {transform_indices = @transform_1, window_bounds = array<i64: 8, 2560>}]} {
    %c0 = arith.constant 0 : index
    %c0_0 = arith.constant 0 : index
    %0 = vector.load %arg1[%c0, %c0_0] : memref<8x1024xf32, #tpu.memory_space<vmem>>, vector<8x1024xf32>
    %c0_1 = arith.constant 0 : index
    %c0_2 = arith.constant 0 : index
    %1 = vector.load %arg2[%c0_1, %c0_2] : memref<8x2560xf32, #tpu.memory_space<vmem>>, vector<8x1024xf32>
    tpu.vector_store %arg2[%c0_1, %c0_2], %0 {strides = array<i32>} : memref<8x2560xf32, #tpu.memory_space<vmem>>, vector<8x1024xf32>,
    %2 = tpu.iota {dimensions = array<i32: 1>} : vector<1x1536xi32>
    %c768_i32 = arith.constant 768 : i32
    %3 = vector.broadcast %c768_i32 : i32 to vector<1x1536xi32>
    %4 = arith.cmpi sge, %2, %3 : vector<1x1536xi32>
    %c1024_i32 = arith.constant 1024 : i32
    %5 = vector.broadcast %c1024_i32 : i32 to vector<1x1536xi32>
    %6 = arith.cmpi slt, %2, %5 : vector<1x1536xi32>
    %7 = arith.andi %4, %6 : vector<1x1536xi1>
    %8 = arith.extui %7 : vector<1x1536xi1> to vector<1x1536xi32>
    %9 = arith.sitofp %8 : vector<1x1536xi32> to vector<1x1536xf32>
    %10 = vector.shape_cast %9 : vector<1x1536xf32> to vector<1x1536xf32>
    %11 = vector.broadcast %10 : vector<1x1536xf32> to vector<8x1536xf32>
    %c0_3 = arith.constant 0 : index
    %c1024 = arith.constant 1024 : index
    %12 = vector.load %arg2[%c0_3, %c1024] : memref<8x2560xf32, #tpu.memory_space<vmem>>, vector<8x1536xf32>
    tpu.vector_store %arg2[%c0_3, %c1024], %11 {strides = array<i32>} : memref<8x2560xf32, #tpu.memory_space<vmem>>, vector<8x1536xf32>,
    return
  }
  func.func @transform_0(%arg0: i32) -> (i32, i32) {
    %c0_i32 = arith.constant 0 : i32
    %c0_i32_0 = arith.constant 0 : i32
    return %arg0, %c0_i32 : i32, i32
  }
  func.func @transform_1(%arg0: i32) -> (i32, i32) {
    %c0_i32 = arith.constant 0 : i32
    %c0_i32_0 = arith.constant 0 : i32
    return %arg0, %c0_i32 : i32, i32
  }
}

</mosaic_0001>

<llo_original>
// kernel: tpu_custom_call.1
$region0: #{tpu_custom_call.1}
  #allocation0 [shape = 'u32[]', space=smem, size = 0x4, offset = 0x4, fixed_abs, tag = 'smem constant byte address 0x4 - core index']
  #allocation1 [shape = 'u32[72,128]{1,0:T(1,128)}', space=vmem, size = 0x9000, scoped, tag = 'internal scratch']
  %s0 = inlined_call_operand.hbm [shape: f32[16,1024], index: 0, kind: input, shape index: {}]
  %s1 = inlined_call_operand.hbm [shape: f32[16,2560], index: 1, kind: output, shape index: {}]
  %s2 = sld [smem:[#allocation0]]
  $region41: #{tpu_custom_call.1} parent=0
    _
  %s4 = ssub.s32 1, %s2
  %s5 = scalar_select 0, %s4, %s2
  $region1: #{tpu_custom_call.1} parent=0
    #allocation2 [shape = 'u8[65536]{0}', space=vmem, size = 0x10000, scoped, tag = 'input window, operand 0']
    #allocation3 [shape = 's32[2]{0}', space=sflag, size = 0x8, scoped, tag = 'scoped memory for tpu_custom_call.1']
    #allocation4 [shape = 's32[2]{0}', space=sflag, size = 0x8, scoped, tag = 'scoped memory for tpu_custom_call.1']
    #allocation5 [shape = 'u8[163840]{0}', space=vmem, size = 0x28000, scoped, tag = 'output window, operand 0']
    %6 = vsyncpa [#allocation3], 0
    %s7 = scalar_lea.sflag [#allocation3], 1
    %8 = vsyncpa %s7, 0
    %9 = vsyncpa [#allocation4], 0
    %s10 = scalar_lea.sflag [#allocation4], 1
    %11 = vsyncpa %s10, 0
    loop: start=0, step=1, limit=4
    $region2: #{tpu_custom_call.1} parent=1 // loop_pre_header
      _
    $region3: #{tpu_custom_call.1} parent=1 // loop_header
      %s13 = sphi 0, %s17
      %p14 = scmp.ge.s32.totalorder %s13, 4
      %s23 = sphi 0, %s25
      %s26 = sphi 0, %s23
      %s27 = sphi 0, %s26
      %s43 = sphi 0, %s27
      %s49 = sphi 0, %s51
      %s52 = sphi 0, %s49
      %s53 = sphi 0, %s52
      %s69 = sphi 0, %s53
    $region4: #{tpu_custom_call.1} parent=1 // loop_header_branch
      %16 = sbr.rel (%p14) target = $region8
    $region5: #{tpu_custom_call.1} parent=1 // loop_body
      %s18 = ssub.s32 %s13, 1
      %s19 = ssub.s32 %s13, 2
      %s20 = sadd.s32 %s13, 1
      %s21 = ssub.s32 %s13, %s20
      %p22 = scmp.eq.s32.totalorder %s21, 0
      %s24 = sadd.s32 %s23, 1
      %s25 = scalar_select %p22, %s23, %s24
      %p28 = pneg %p22
      %p29 = scmp.eq.s32.totalorder %s13, 1
      %p30 = por %p28, %p29
      %p31 = scmp.ne.s32.totalorder %s23, %s26
      %p32 = scmp.eq.s32.totalorder %s13, 0
      %p33 = por %p31, %p32
      %p34 = scmp.ne.s32.totalorder %s23, %s26
      %p35 = scmp.eq.s32.totalorder %s18, 1
      %p36 = por %p34, %p35
      %p37 = scmp.ne.s32.totalorder %s26, %s27
      %p38 = scmp.eq.s32.totalorder %s18, 0
      %p39 = por %p37, %p38
      %p40 = scmp.ne.s32.totalorder %s26, %s27
      %p41 = scmp.eq.s32.totalorder %s19, 1
      %p42 = por %p40, %p41
      %p44 = scmp.ne.s32.totalorder %s27, %s43
      %p45 = scmp.eq.s32.totalorder %s19, 0
      %p46 = por %p44, %p45
      %s47 = ssub.s32 %s13, %s20
      %p48 = scmp.eq.s32.totalorder %s47, 0
      %s50 = sadd.s32 %s49, 1
      %s51 = scalar_select %p48, %s49, %s50
      %p54 = pneg %p48
      %p55 = scmp.eq.s32.totalorder %s13, 1
      %p56 = por %p54, %p55
      %p57 = scmp.ne.s32.totalorder %s49, %s52
      %p58 = scmp.eq.s32.totalorder %s13, 0
      %p59 = por %p57, %p58
      %p60 = scmp.ne.s32.totalorder %s49, %s52
      %p61 = scmp.eq.s32.totalorder %s18, 1
      %p62 = por %p60, %p61
      %p63 = scmp.ne.s32.totalorder %s52, %s53
      %p64 = scmp.eq.s32.totalorder %s18, 0
      %p65 = por %p63, %p64
      %p66 = scmp.ne.s32.totalorder %s52, %s53
      %p67 = scmp.eq.s32.totalorder %s19, 1
      %p68 = por %p66, %p67
      %p70 = scmp.ne.s32.totalorder %s53, %s69
      %p71 = scmp.eq.s32.totalorder %s19, 0
      %p72 = por %p70, %p71
      %p73 = scmp.le.s32.totalorder 1, %s13
      %p74 = scmp.lt.s32.totalorder %s13, 3
      %p75 = pnand %p73, %p74
      %p76 = pneg %p75
      // Predicated region
      $region9: #{tpu_custom_call.1} parent=5 // pred_check
        _
      $region10: #{tpu_custom_call.1} parent=5 // pred_check_branch
        %78 = sbr.rel (%p75) target = $region12
      $region11: #{tpu_custom_call.1} parent=5 // pred_region
        %s79 = ssub.s32 %s13, 1
      $region12: #{tpu_custom_call.1} parent=5 // pred_fallthru
        _
      %p80 = scmp.lt.s32.totalorder %s13, 2
      // Predicated region
      $region13: #{tpu_custom_call.1} parent=5 // pred_check
        %p81 = pneg %p80
      $region14: #{tpu_custom_call.1} parent=5 // pred_check_branch
        %83 = sbr.rel (%p81) target = $region16
      $region15: #{tpu_custom_call.1} parent=5 // pred_region
        // Predicated region
        $region17: #{tpu_custom_call.1} parent=15 // pred_check
          %p84 = pneg %p33
        $region18: #{tpu_custom_call.1} parent=15 // pred_check_branch
          %86 = sbr.rel (%p84) target = $region20
        $region19: #{tpu_custom_call.1} parent=15 // pred_region
          %s87 = sand.u32 %s23, 1
          %s88 = scalar_lea.sflag [#allocation3], %s87
          %s89 = sand.u32 %s23, 1
          %s90 = smul.addr %s89, 64
          %s91 = scalar_lea.vmem [#allocation2], %s90
          %93 = vsyncadd %s88, 0
          %s94 = smul.addr %s13, 8
          %s95 = smul.addr %s94, 8
          %s96 = scalar_lea.hbm %s0, %s95
          %s98 = sshll.u32 %s96, 4
          %s99 = int_to_ptr.hbm [resolvable:$true] %s98
          %s100 = sshll.u32 %s91, 4
          %s101 = int_to_ptr.vmem [resolvable:$true] %s100
          %103 = dma.hbm_to_vmem [thread:$0]  %s99, 1024, %s101, %s88
        $region20: #{tpu_custom_call.1} parent=15 // pred_fallthru
          _
      $region16: #{tpu_custom_call.1} parent=5 // pred_fallthru
        _
      %p104 = scmp.le.s32.totalorder 1, %s13
      %p105 = scmp.lt.s32.totalorder %s13, 3
      %p106 = pnand %p104, %p105
      %p107 = pneg %p106
      // Predicated region
      $region21: #{tpu_custom_call.1} parent=5 // pred_check
        _
      $region22: #{tpu_custom_call.1} parent=5 // pred_check_branch
        %109 = sbr.rel (%p106) target = $region24
      $region23: #{tpu_custom_call.1} parent=5 // pred_region
        %s110 = ssub.s32 %s13, 1
        %s111 = sand.u32 %s26, 1
        %s112 = scalar_lea.sflag [#allocation3], %s111
        %s113 = sand.u32 %s26, 1
        %s114 = smul.addr %s113, 64
        %s115 = scalar_lea.vmem [#allocation2], %s114
        // Predicated region
        $region25: #{tpu_custom_call.1} parent=23 // pred_check
          %p116 = pneg %p39
        $region26: #{tpu_custom_call.1} parent=23 // pred_check_branch
          %118 = sbr.rel (%p116) target = $region28
        $region27: #{tpu_custom_call.1} parent=23 // pred_region
          %120 = dma.done %s112, 1024
        $region28: #{tpu_custom_call.1} parent=23 // pred_fallthru
          _
        %s121 = sand.u32 %s26, 1
        %s122 = scalar_lea.sflag [#allocation3], %s121
        %s123 = sand.u32 %s26, 1
        %s124 = smul.addr %s123, 64
        %s125 = scalar_lea.vmem [#allocation2], %s124
        %p126 = pneg %p39
        %p127 = pneg %p36
        %p128 = pneg %p65
        %p129 = pneg %p62
        %s130 = sand.u32 %s52, 1
        %s131 = scalar_lea.sflag [#allocation4], %s130
        %s132 = sand.u32 %s52, 1
        %s133 = smul.addr %s132, 160
        %s134 = scalar_lea.vmem [#allocation5], %s133
        %v135 = vld [vmem:[%s115] sm:$0xff]
        %v136 = vld [vmem:[%s115 + $0x8] sm:$0xff]
        %v137 = vld [vmem:[%s115 + $0x10] sm:$0xff]
        %v138 = vld [vmem:[%s115 + $0x18] sm:$0xff]
        %v139 = vld [vmem:[%s115 + $0x20] sm:$0xff]
        %v140 = vld [vmem:[%s115 + $0x28] sm:$0xff]
        %v141 = vld [vmem:[%s115 + $0x30] sm:$0xff]
        %v142 = vld [vmem:[%s115 + $0x38] sm:$0xff]
        %143 = vst [vmem:[%s134] sm:$0xff] %v135
        %144 = vst [vmem:[%s134 + $0x8] sm:$0xff] %v136
        %145 = vst [vmem:[%s134 + $0x10] sm:$0xff] %v137
        %146 = vst [vmem:[%s134 + $0x18] sm:$0xff] %v138
        %147 = vst [vmem:[%s134 + $0x20] sm:$0xff] %v139
        %148 = vst [vmem:[%s134 + $0x28] sm:$0xff] %v140
        %149 = vst [vmem:[%s134 + $0x30] sm:$0xff] %v141
        %150 = vst [vmem:[%s134 + $0x38] sm:$0xff] %v142
        %v151 = vlaneseq
        %v152 = vand.u32 %v151, 127
        %v153 = vadd.s32 %v152, 128
        %v154 = vadd.s32 %v152, 256
        %v155 = vadd.s32 %v152, 384
        %v156 = vadd.s32 %v152, 512
        %v157 = vadd.s32 %v152, 640
        %v158 = vadd.s32 %v152, 768
        %v159 = vadd.s32 %v152, 896
        %v160 = vadd.s32 %v152, 1024
        %v161 = vadd.s32 %v152, 1152
        %v162 = vadd.s32 %v152, 1280
        %v163 = vadd.s32 %v152, 1408
        %vm164 = vcmp.ge.s32.totalorder %v152, 768
        %vm165 = vcmp.ge.s32.totalorder %v153, 768
        %vm166 = vcmp.ge.s32.totalorder %v154, 768
        %vm167 = vcmp.ge.s32.totalorder %v155, 768
        %vm168 = vcmp.ge.s32.totalorder %v156, 768
        %vm169 = vcmp.ge.s32.totalorder %v157, 768
        %vm170 = vcmp.ge.s32.totalorder %v158, 768
        %vm171 = vcmp.ge.s32.totalorder %v159, 768
        %vm172 = vcmp.ge.s32.totalorder %v160, 768
        %vm173 = vcmp.ge.s32.totalorder %v161, 768
        %vm174 = vcmp.ge.s32.totalorder %v162, 768
        %vm175 = vcmp.ge.s32.totalorder %v163, 768
        %vm176 = vcmp.lt.s32.totalorder %v152, 1024
        %vm177 = vcmp.lt.s32.totalorder %v153, 1024
        %vm178 = vcmp.lt.s32.totalorder %v154, 1024
        %vm179 = vcmp.lt.s32.totalorder %v155, 1024
        %vm180 = vcmp.lt.s32.totalorder %v156, 1024
        %vm181 = vcmp.lt.s32.totalorder %v157, 1024
        %vm182 = vcmp.lt.s32.totalorder %v158, 1024
        %vm183 = vcmp.lt.s32.totalorder %v159, 1024
        %vm184 = vcmp.lt.s32.totalorder %v160, 1024
        %vm185 = vcmp.lt.s32.totalorder %v161, 1024
        %vm186 = vcmp.lt.s32.totalorder %v162, 1024
        %vm187 = vcmp.lt.s32.totalorder %v163, 1024
        %vm188 = vmand %vm164, %vm176
        %vm189 = vmand %vm165, %vm177
        %vm190 = vmand %vm166, %vm178
        %vm191 = vmand %vm167, %vm179
        %vm192 = vmand %vm168, %vm180
        %vm193 = vmand %vm169, %vm181
        %vm194 = vmand %vm170, %vm182
        %vm195 = vmand %vm171, %vm183
        %vm196 = vmand %vm172, %vm184
        %vm197 = vmand %vm173, %vm185
        %vm198 = vmand %vm174, %vm186
        %vm199 = vmand %vm175, %vm187
        %v200 = vsel %vm188, 1, 0
        %v201 = vsel %vm189, 1, 0
        %v202 = vsel %vm190, 1, 0
        %v203 = vsel %vm191, 1, 0
        %v204 = vsel %vm192, 1, 0
        %v205 = vsel %vm193, 1, 0
        %v206 = vsel %vm194, 1, 0
        %v207 = vsel %vm195, 1, 0
        %v208 = vsel %vm196, 1, 0
        %v209 = vsel %vm197, 1, 0
        %v210 = vsel %vm198, 1, 0
        %v211 = vsel %vm199, 1, 0
        %v212 = vcvt.s32.f32 %v200
        %v213 = vcvt.s32.f32 %v201
        %v214 = vcvt.s32.f32 %v202
        %v215 = vcvt.s32.f32 %v203
        %v216 = vcvt.s32.f32 %v204
        %v217 = vcvt.s32.f32 %v205
        %v218 = vcvt.s32.f32 %v206
        %v219 = vcvt.s32.f32 %v207
        %v220 = vcvt.s32.f32 %v208
        %v221 = vcvt.s32.f32 %v209
        %v222 = vcvt.s32.f32 %v210
        %v223 = vcvt.s32.f32 %v211
        %224 = vst [vmem:[%s134 + $0x40] sm:$0xff] %v212
        %225 = vst [vmem:[%s134 + $0x48] sm:$0xff] %v213
        %226 = vst [vmem:[%s134 + $0x50] sm:$0xff] %v214
        %227 = vst [vmem:[%s134 + $0x58] sm:$0xff] %v215
        %228 = vst [vmem:[%s134 + $0x60] sm:$0xff] %v216
        %229 = vst [vmem:[%s134 + $0x68] sm:$0xff] %v217
        %230 = vst [vmem:[%s134 + $0x70] sm:$0xff] %v218
        %231 = vst [vmem:[%s134 + $0x78] sm:$0xff] %v219
        %232 = vst [vmem:[%s134 + $0x80] sm:$0xff] %v220
        %233 = vst [vmem:[%s134 + $0x88] sm:$0xff] %v221
        %234 = vst [vmem:[%s134 + $0x90] sm:$0xff] %v222
        %235 = vst [vmem:[%s134 + $0x98] sm:$0xff] %v223
        %s236 = sand.u32 %s52, 1
        %s237 = scalar_lea.sflag [#allocation4], %s236
        %s238 = sand.u32 %s52, 1
        %s239 = smul.addr %s238, 160
        %s240 = scalar_lea.vmem [#allocation5], %s239
        // Predicated region
        $region29: #{tpu_custom_call.1} parent=23 // pred_check
          %p241 = pneg %p62
        $region30: #{tpu_custom_call.1} parent=23 // pred_check_branch
          %243 = sbr.rel (%p241) target = $region32
        $region31: #{tpu_custom_call.1} parent=23 // pred_region
          %245 = vsyncadd %s237, 0
          %s246 = smul.addr %s18, 20
          %s247 = smul.addr %s246, 8
          %s248 = scalar_lea.hbm %s1, %s247
          %s250 = sshll.u32 %s240, 4
          %s251 = int_to_ptr.vmem [resolvable:$true] %s250
          %s252 = sshll.u32 %s248, 4
          %s253 = int_to_ptr.hbm [resolvable:$true] %s252
          %255 = dma.vmem_to_hbm [thread:$0]  %s251, 2560, %s253, %s237
        $region32: #{tpu_custom_call.1} parent=23 // pred_fallthru
          _
      $region24: #{tpu_custom_call.1} parent=5 // pred_fallthru
        _
      %p256 = scmp.le.s32.totalorder 2, %s13
      // Predicated region
      $region33: #{tpu_custom_call.1} parent=5 // pred_check
        %p257 = pneg %p256
      $region34: #{tpu_custom_call.1} parent=5 // pred_check_branch
        %259 = sbr.rel (%p257) target = $region36
      $region35: #{tpu_custom_call.1} parent=5 // pred_region
        %s260 = ssub.s32 %s13, 2
        // Predicated region
        $region37: #{tpu_custom_call.1} parent=35 // pred_check
          %p261 = pneg %p68
        $region38: #{tpu_custom_call.1} parent=35 // pred_check_branch
          %263 = sbr.rel (%p261) target = $region40
        $region39: #{tpu_custom_call.1} parent=35 // pred_region
          %s264 = sand.u32 %s53, 1
          %s265 = scalar_lea.sflag [#allocation4], %s264
          %s266 = sand.u32 %s53, 1
          %s267 = smul.addr %s266, 160
          %s268 = scalar_lea.vmem [#allocation5], %s267
          %270 = dma.done %s265, 2560
        $region40: #{tpu_custom_call.1} parent=35 // pred_fallthru
          _
      $region36: #{tpu_custom_call.1} parent=5 // pred_fallthru
        _
    $region6: #{tpu_custom_call.1} parent=1 // loop_footer
      %s17 = sadd.s32 1, %s13
    $region7: #{tpu_custom_call.1} parent=1 // loop_footer_branch
      %12 = sbr.rel target = $region3
    $region8: #{tpu_custom_call.1} parent=1 // loop_exit
      _
    %271 = vsyncpa [#allocation3], 1
    %s272 = scalar_lea.sflag [#allocation3], 1
    %273 = vsyncpa %s272, 1
    %274 = vsyncpa [#allocation4], 1
    %s275 = scalar_lea.sflag [#allocation4], 1
    %276 = vsyncpa %s275, 1

</llo_original>
